<compile_context>
chip_gen: v7x
topology: tpu7x:2x2x1
jax: 0.10.0
libtpu: 0.0.40
codegen_flags: <defaults>
</compile_context>

<pallas_src>
import math
from functools import partial

import jax
import jax.numpy as jnp
from jax import lax
from jax.experimental import pallas as pl
from jax.experimental.pallas import tpu as pltpu  # noqa: F401  (TPU backend)

# ---- model hyper-parameters (from the module) ----
IN_F = 8
D_MODEL = 32
NHEAD = 4
DFF = 32
LN_EPS = 1e-5                  # nn.LayerNorm default eps
OUT_PAD = 128                  # lane-dense padded classifier width
NEG_INF = -1e30                # masks cross-sequence attention entries

# small test shapes, consistent with the module (B sequences of length S)
B, S = 2, 16

# number of constant rows appended after the (M, 32) positional-encoding block
EXTRA_ROWS = 120


def _round_up(v, m):
    return ((v + m - 1) // m) * m


def _batch_index(idx, seq):
    """idx // seq for non-negative int32 vectors (shift when seq is 2^k)."""
    if seq & (seq - 1) == 0:
        return idx >> int(math.log2(seq))
    return idx // seq


def _layernorm(x, gamma, beta):
    mu = jnp.mean(x, axis=-1, keepdims=True)
    var = jnp.mean((x - mu) ** 2, axis=-1, keepdims=True)
    return (x - mu) * lax.rsqrt(var + LN_EPS) * gamma + beta


def transformer_kernel(x_ref, w_ref, out_ref, *, batch, seq, b_pad):
    M = batch * seq
    f32, bf16 = jnp.float32, jnp.bfloat16

    # row offsets inside the packed slab (see pack_params; all static)
    r_pe, r_w0, r_vr = 0, M, M + 8
    r_w1, r_w2 = M + 16, M + 48
    r_wc, r_bc = M + 80, M + 112

    # --- linear0 + positional encoding (b0 folded into the pe rows) ---
    x = x_ref[...]                                              # (M, 8)
    w0 = w_ref[r_w0:r_w0 + IN_F, 0:D_MODEL]                     # (8, 32)
    h = jnp.dot(x, w0, preferred_element_type=f32)
    h = h + w_ref[r_pe:r_pe + M, 0:D_MODEL]                     # (M, 32)

    # --- dense attention: one (M, M) score matmul for all sequences; the
    #     block-diagonal mask (no cross-sequence attention) is generated
    #     in-kernel from iotas instead of being DMA'd ---
    scale = 1.0 / math.sqrt(D_MODEL // NHEAD)
    hb = h.astype(bf16)
    s = lax.dot_general(hb, hb, dimension_numbers=(((1,), (1,)), ((), ())),
                        preferred_element_type=f32) * scale     # (M, M) f32
    rows_b = _batch_index(lax.broadcasted_iota(jnp.int32, (M, M), 0), seq)
    cols_b = _batch_index(lax.broadcasted_iota(jnp.int32, (M, M), 1), seq)
    s = jnp.where(rows_b == cols_b, s, NEG_INF)
    s = s - jnp.max(s, axis=-1, keepdims=True)
    p = jnp.exp(s)
    p = p * pl.reciprocal(jnp.sum(p, axis=-1, keepdims=True), approx=True)
    a = jnp.dot(p.astype(bf16), hb, preferred_element_type=f32)  # (M, 32)

    # residual + norm1   (dropout1 = identity in eval)
    g1 = w_ref[r_vr + 2:r_vr + 3, 0:D_MODEL]
    be1 = w_ref[r_vr + 3:r_vr + 4, 0:D_MODEL]
    h = _layernorm(h + a, g1, be1)

    # feed-forward: linear1 -> relu -> linear2  (dropout = identity)
    w1 = w_ref[r_w1:r_w1 + D_MODEL, 0:DFF].astype(bf16)
    b1 = w_ref[r_vr + 0:r_vr + 1, 0:DFF]
    ff = jnp.dot(h.astype(bf16), w1, preferred_element_type=f32) + b1
    ff = jnp.maximum(ff, 0.0)
    w2 = w_ref[r_w2:r_w2 + DFF, 0:D_MODEL].astype(bf16)
    b2 = w_ref[r_vr + 1:r_vr + 2, 0:D_MODEL]
    ff = jnp.dot(ff.astype(bf16), w2, preferred_element_type=f32) + b2

    # residual + norm2   (dropout2 = identity)
    g2 = w_ref[r_vr + 4:r_vr + 5, 0:D_MODEL]
    be2 = w_ref[r_vr + 5:r_vr + 6, 0:D_MODEL]
    h = _layernorm(h + ff, g2, be2)

    # --- per-sequence mean over S as a matmul; pooling matrix generated from
    #     iotas (rows >= batch are all-zero -> out rows >= batch are just bc,
    #     intentionally garbage, sliced off by the wrapper) ---
    prow = lax.broadcasted_iota(jnp.int32, (b_pad, M), 0)
    pcol = _batch_index(lax.broadcasted_iota(jnp.int32, (b_pad, M), 1), seq)
    mpool = jnp.where(prow == pcol, 1.0 / seq, 0.0)              # (b_pad, M)
    pooled = jnp.dot(mpool, h, preferred_element_type=f32)       # (b_pad, 32)

    # classifier against the lane-padded weight -> single dense (b_pad,128) store
    wc = w_ref[r_wc:r_wc + D_MODEL, :]                           # (32, 128)
    bc = w_ref[r_bc:r_bc + 1, :]                                 # (1, 128)
    out_ref[...] = jnp.dot(pooled, wc, preferred_element_type=f32) + bc


def positional_encoding(seq_len, d_model):
    pos = jnp.arange(seq_len, dtype=jnp.float32)[:, None]
    div = jnp.exp(jnp.arange(0, d_model, 2, dtype=jnp.float32)
                  * (-math.log(10000.0) / d_model))
    pe = jnp.zeros((seq_len, d_model), jnp.float32)
    pe = pe.at[:, 0::2].set(jnp.sin(pos * div))
    pe = pe.at[:, 1::2].set(jnp.cos(pos * div))
    return pe


def init_params(key):
    ks = jax.random.split(key, 8)
    sc = 0.02
    w0 = sc * jax.random.normal(ks[0], (IN_F, D_MODEL), jnp.float32)
    b0 = sc * jax.random.normal(ks[1], (1, D_MODEL), jnp.float32)
    w1 = sc * jax.random.normal(ks[2], (D_MODEL, DFF), jnp.float32)
    b1 = sc * jax.random.normal(ks[3], (1, DFF), jnp.float32)
    w2 = sc * jax.random.normal(ks[4], (DFF, D_MODEL), jnp.float32)
    b2 = sc * jax.random.normal(ks[5], (1, D_MODEL), jnp.float32)
    g1 = jnp.ones((1, D_MODEL), jnp.float32)
    be1 = jnp.zeros((1, D_MODEL), jnp.float32)
    g2 = jnp.ones((1, D_MODEL), jnp.float32)
    be2 = jnp.zeros((1, D_MODEL), jnp.float32)
    wc = sc * jax.random.normal(ks[6], (D_MODEL, 2), jnp.float32)
    bc = sc * jax.random.normal(ks[7], (1, 2), jnp.float32)
    pe = positional_encoding(S, D_MODEL)
    return (pe, w0, b0, w1, b1, w2, b2, g1, be1, g2, be2, wc, bc)


def pack_params(params, batch, seq):
    """Pack every constant into one lane-dense (batch*seq + 120, 128) f32 slab."""
    pe, w0, b0, w1, b1, w2, b2, g1, be1, g2, be2, wc, bc = params
    M = batch * seq
    assert M % 8 == 0, M
    W = jnp.zeros((M + EXTRA_ROWS, OUT_PAD), jnp.float32)
    peb0 = jnp.tile(pe, (batch, 1)) + b0                          # (M, 32)
    W = W.at[0:M, 0:D_MODEL].set(peb0)
    W = W.at[M:M + IN_F, 0:D_MODEL].set(w0)
    vrow = jnp.concatenate([b1, b2, g1, be1, g2, be2], axis=0)    # (6, 32)
    W = W.at[M + 8:M + 14, 0:D_MODEL].set(vrow)
    W = W.at[M + 16:M + 48, 0:DFF].set(w1)
    W = W.at[M + 48:M + 80, 0:D_MODEL].set(w2)
    W = W.at[M + 80:M + 112, 0:2].set(wc)
    W = W.at[M + 112, 0:2].set(bc[0])
    return W


def forward(x, wslab):
    """x: (batch, seq, 8) -> logits (batch, 2). Single gridless pallas_call."""
    batch, seq, _ = x.shape
    M = batch * seq
    assert M % 8 == 0 and wslab.shape == (M + EXTRA_ROWS, OUT_PAD)
    b_pad = max(8, _round_up(batch, 8))
    x2d = x.reshape(M, IN_F)

    flops = 2 * (M * IN_F * D_MODEL + 2 * M * M * D_MODEL
                 + M * D_MODEL * DFF + M * DFF * D_MODEL
                 + b_pad * M * D_MODEL + b_pad * D_MODEL * OUT_PAD)
    bytes_accessed = (x2d.size + wslab.size + b_pad * OUT_PAD) * 4

    out = pl.pallas_call(
        partial(transformer_kernel, batch=batch, seq=seq, b_pad=b_pad),
        out_shape=jax.ShapeDtypeStruct((b_pad, OUT_PAD), jnp.float32),
        cost_estimate=pl.CostEstimate(flops=flops,
                                      transcendentals=M * M + 3 * M,
                                      bytes_accessed=bytes_accessed),
    )(x2d, wslab)
    return out[:batch, :2]


def reference(x, params):
    """Pure-JAX reference mirroring the PyTorch forward (eval mode)."""
    pe, w0, b0, w1, b1, w2, b2, g1, be1, g2, be2, wc, bc = params
    seq = x.shape[1]
    h = x @ w0 + b0 + pe[None, :seq]
    scale = 1.0 / math.sqrt(D_MODEL // NHEAD)
    s = jnp.einsum('bqd,bkd->bqk', h, h) * scale
    p = jax.nn.softmax(s, axis=-1)
    a = jnp.einsum('bqk,bkd->bqd', p, h)

    def ln(t, g, b):
        mu = t.mean(-1, keepdims=True)
        var = ((t - mu) ** 2).mean(-1, keepdims=True)
        return (t - mu) / jnp.sqrt(var + LN_EPS) * g + b

    h = ln(h + a, g1, be1)
    ff = jnp.maximum(h @ w1 + b1, 0.0) @ w2 + b2
    h = ln(h + ff, g2, be2)
    pooled = h.mean(axis=1)
    return pooled @ wc + bc

# TODO(synk): attn_mode='strided' path not implemented (requires n_ctx/local_ctx
# to be a multiple of blocksize=32, impossible at seq=16); dense path only.


if __name__ == "__main__":
    key = jax.random.PRNGKey(0)
    k_x, k_p = jax.random.split(key)
    x = jax.random.normal(k_x, (B, S, IN_F), jnp.float32)
    params = init_params(k_p)
    wslab = pack_params(params, B, S)      # packed once, outside the hot path

    out = jax.block_until_ready(forward(x, wslab))
    ref = reference(x, params)

    assert out.shape == (B, 2), out.shape
    assert bool(jnp.all(jnp.isfinite(out)))
    assert bool(jnp.allclose(out, ref, rtol=2e-2, atol=2e-2)), (out, ref)
    print("KERNEL_OK")
</pallas_src>

<mosaic_0001>
module attributes {stable_mosaic.version = 11 : i64} {
  func.func @transformer_kernel(%arg0: memref<32x8xf32, #tpu.memory_space<vmem>>, %arg1: memref<152x128xf32, #tpu.memory_space<vmem>>, %arg2: memref<8x128xf32, #tpu.memory_space<vmem>>) attributes {dimension_semantics = [], scalar_prefetch = 0 : i64, scratch_operands = 0 : i64, tpu.core_type = #tpu.core_type<tc>} {
    %c0 = arith.constant 0 : index
    %c0_0 = arith.constant 0 : index
    %0 = vector.load %arg0[%c0, %c0_0] : memref<32x8xf32, #tpu.memory_space<vmem>>, vector<32x8xf32>
    %c32 = arith.constant 32 : index
    %c0_1 = arith.constant 0 : index
    %1 = vector.load %arg1[%c32, %c0_1] : memref<152x128xf32, #tpu.memory_space<vmem>>, vector<8x32xf32>
    %cst = arith.constant dense<0.000000e+00> : vector<32x32xf32>
    %2 = tpu.matmul %0, %1, %cst {dimension_numbers = #tpu.dot_dimension_numbers<[1], [0], [0], [1], [0, 0, 1, 1], [], []>} : vector<32x8xf32>, vector<8x32xf32>, vector<32x32xf32> -> vector<32x32xf32>
    %c0_2 = arith.constant 0 : index
    %c0_3 = arith.constant 0 : index
    %3 = vector.load %arg1[%c0_2, %c0_3] : memref<152x128xf32, #tpu.memory_space<vmem>>, vector<32x32xf32>
    %4 = arith.addf %2, %3 : vector<32x32xf32>
    %5 = arith.truncf %4 : vector<32x32xf32> to vector<32x32xbf16>
    %cst_4 = arith.constant dense<0.000000e+00> : vector<32x32xf32>
    %6 = tpu.matmul %5, %5, %cst_4 {dimension_numbers = #tpu.dot_dimension_numbers<[1], [1], [0], [0], [0, 0, 1, 0], [], []>} : vector<32x32xbf16>, vector<32x32xbf16>, vector<32x32xf32> -> vector<32x32xf32>
    %cst_5 = arith.constant 0.353553385 : f32
    %7 = vector.broadcast %cst_5 : f32 to vector<32x32xf32>
    %8 = arith.mulf %6, %7 : vector<32x32xf32>
    %9 = tpu.iota {dimensions = array<i32: 0>} : vector<32x32xi32>
    %c4_i32 = arith.constant 4 : i32
    %10 = vector.broadcast %c4_i32 : i32 to vector<32x32xi32>
    %11 = arith.shrsi %9, %10 : vector<32x32xi32>
    %12 = tpu.iota {dimensions = array<i32: 1>} : vector<32x32xi32>
    %c4_i32_6 = arith.constant 4 : i32
    %13 = vector.broadcast %c4_i32_6 : i32 to vector<32x32xi32>
    %14 = arith.shrsi %12, %13 : vector<32x32xi32>
    %15 = arith.cmpi eq, %11, %14 : vector<32x32xi32>
    %cst_7 = arith.constant -1.000000e+30 : f32
    %16 = vector.broadcast %cst_7 : f32 to vector<32x32xf32>
    %17 = arith.select %15, %8, %16 : vector<32x32xi1>, vector<32x32xf32>
    %cst_8 = arith.constant dense<0xFF800000> : vector<32xf32>
    %18 = vector.multi_reduction <maximumf>, %17, %cst_8 [1] : vector<32x32xf32> to vector<32xf32>
    %19 = vector.shape_cast %18 : vector<32xf32> to vector<32x1xf32>
    %20 = vector.broadcast %19 : vector<32x1xf32> to vector<32x32xf32>
    %21 = arith.subf %17, %20 : vector<32x32xf32>
    %22 = math.exp %21 : vector<32x32xf32>
    %cst_9 = arith.constant dense<0.000000e+00> : vector<32xf32>
    %23 = vector.multi_reduction <add>, %22, %cst_9 [1] : vector<32x32xf32> to vector<32xf32>
    %24 = vector.shape_cast %23 : vector<32xf32> to vector<32x1xf32>
    %25 = tpu.reciprocal %24 {approx = true} : vector<32x1xf32> -> vector<32x1xf32>
    %26 = vector.broadcast %25 : vector<32x1xf32> to vector<32x32xf32>
    %27 = arith.mulf %22, %26 : vector<32x32xf32>
    %28 = arith.truncf %27 : vector<32x32xf32> to vector<32x32xbf16>
    %cst_10 = arith.constant dense<0.000000e+00> : vector<32x32xf32>
    %29 = tpu.matmul %28, %5, %cst_10 {dimension_numbers = #tpu.dot_dimension_numbers<[1], [0], [0], [1], [0, 0, 1, 1], [], []>} : vector<32x32xbf16>, vector<32x32xbf16>, vector<32x32xf32> -> vector<32x32xf32>
    %c42 = arith.constant 42 : index
    %c0_11 = arith.constant 0 : index
    %30 = vector.load %arg1[%c42, %c0_11] : memref<152x128xf32, #tpu.memory_space<vmem>>, vector<1x32xf32>
    %c43 = arith.constant 43 : index
    %c0_12 = arith.constant 0 : index
    %31 = vector.load %arg1[%c43, %c0_12] : memref<152x128xf32, #tpu.memory_space<vmem>>, vector<1x32xf32>
    %32 = arith.addf %4, %29 : vector<32x32xf32>
    %cst_13 = arith.constant dense<0.000000e+00> : vector<32xf32>
    %33 = vector.multi_reduction <add>, %32, %cst_13 [1] : vector<32x32xf32> to vector<32xf32>
    %34 = vector.shape_cast %33 : vector<32xf32> to vector<32x1xf32>
    %cst_14 = arith.constant 3.200000e+01 : f32
    %35 = vector.broadcast %cst_14 : f32 to vector<32x1xf32>
    %36 = arith.divf %34, %35 : vector<32x1xf32>
    %37 = vector.broadcast %36 : vector<32x1xf32> to vector<32x32xf32>
    %38 = arith.subf %32, %37 : vector<32x32xf32>
    %39 = arith.mulf %38, %38 : vector<32x32xf32>
    %cst_15 = arith.constant dense<0.000000e+00> : vector<32xf32>
    %40 = vector.multi_reduction <add>, %39, %cst_15 [1] : vector<32x32xf32> to vector<32xf32>
    %41 = vector.shape_cast %40 : vector<32xf32> to vector<32x1xf32>
    %cst_16 = arith.constant 3.200000e+01 : f32
    %42 = vector.broadcast %cst_16 : f32 to vector<32x1xf32>
    %43 = arith.divf %41, %42 : vector<32x1xf32>
    %44 = vector.broadcast %36 : vector<32x1xf32> to vector<32x32xf32>
    %45 = arith.subf %32, %44 : vector<32x32xf32>
    %cst_17 = arith.constant 9.99999974E-6 : f32
    %46 = vector.broadcast %cst_17 : f32 to vector<32x1xf32>
    %47 = arith.addf %43, %46 : vector<32x1xf32>
    %48 = math.rsqrt %47 : vector<32x1xf32>
    %49 = vector.broadcast %48 : vector<32x1xf32> to vector<32x32xf32>
    %50 = arith.mulf %45, %49 : vector<32x32xf32>
    %51 = vector.broadcast %30 : vector<1x32xf32> to vector<32x32xf32>
    %52 = arith.mulf %50, %51 : vector<32x32xf32>
    %53 = vector.broadcast %31 : vector<1x32xf32> to vector<32x32xf32>
    %54 = arith.addf %52, %53 : vector<32x32xf32>
    %c48 = arith.constant 48 : index
    %c0_18 = arith.constant 0 : index
    %55 = vector.load %arg1[%c48, %c0_18] : memref<152x128xf32, #tpu.memory_space<vmem>>, vector<32x32xf32>
    %56 = arith.truncf %55 : vector<32x32xf32> to vector<32x32xbf16>
    %c40 = arith.constant 40 : index
    %c0_19 = arith.constant 0 : index
    %57 = vector.load %arg1[%c40, %c0_19] : memref<152x128xf32, #tpu.memory_space<vmem>>, vector<1x32xf32>
    %58 = arith.truncf %54 : vector<32x32xf32> to vector<32x32xbf16>
    %cst_20 = arith.constant dense<0.000000e+00> : vector<32x32xf32>
    %59 = tpu.matmul %58, %56, %cst_20 {dimension_numbers = #tpu.dot_dimension_numbers<[1], [0], [0], [1], [0, 0, 1, 1], [], []>} : vector<32x32xbf16>, vector<32x32xbf16>, vector<32x32xf32> -> vector<32x32xf32>
    %60 = vector.broadcast %57 : vector<1x32xf32> to vector<32x32xf32>
    %61 = arith.addf %59, %60 : vector<32x32xf32>
    %cst_21 = arith.constant 0.000000e+00 : f32
    %62 = vector.broadcast %cst_21 : f32 to vector<32x32xf32>
    %63 = arith.maximumf %61, %62 : vector<32x32xf32>
    %c80 = arith.constant 80 : index
    %c0_22 = arith.constant 0 : index
    %64 = vector.load %arg1[%c80, %c0_22] : memref<152x128xf32, #tpu.memory_space<vmem>>, vector<32x32xf32>
    %65 = arith.truncf %64 : vector<32x32xf32> to vector<32x32xbf16>
    %c41 = arith.constant 41 : index
    %c0_23 = arith.constant 0 : index
    %66 = vector.load %arg1[%c41, %c0_23] : memref<152x128xf32, #tpu.memory_space<vmem>>, vector<1x32xf32>
    %67 = arith.truncf %63 : vector<32x32xf32> to vector<32x32xbf16>
    %cst_24 = arith.constant dense<0.000000e+00> : vector<32x32xf32>
    %68 = tpu.matmul %67, %65, %cst_24 {dimension_numbers = #tpu.dot_dimension_numbers<[1], [0], [0], [1], [0, 0, 1, 1], [], []>} : vector<32x32xbf16>, vector<32x32xbf16>, vector<32x32xf32> -> vector<32x32xf32>
    %69 = vector.broadcast %66 : vector<1x32xf32> to vector<32x32xf32>
    %70 = arith.addf %68, %69 : vector<32x32xf32>
    %c44 = arith.constant 44 : index
    %c0_25 = arith.constant 0 : index
    %71 = vector.load %arg1[%c44, %c0_25] : memref<152x128xf32, #tpu.memory_space<vmem>>, vector<1x32xf32>
    %c45 = arith.constant 45 : index
    %c0_26 = arith.constant 0 : index
    %72 = vector.load %arg1[%c45, %c0_26] : memref<152x128xf32, #tpu.memory_space<vmem>>, vector<1x32xf32>
    %73 = arith.addf %54, %70 : vector<32x32xf32>
    %cst_27 = arith.constant dense<0.000000e+00> : vector<32xf32>
    %74 = vector.multi_reduction <add>, %73, %cst_27 [1] : vector<32x32xf32> to vector<32xf32>
    %75 = vector.shape_cast %74 : vector<32xf32> to vector<32x1xf32>
    %cst_28 = arith.constant 3.200000e+01 : f32
    %76 = vector.broadcast %cst_28 : f32 to vector<32x1xf32>
    %77 = arith.divf %75, %76 : vector<32x1xf32>
    %78 = vector.broadcast %77 : vector<32x1xf32> to vector<32x32xf32>
    %79 = arith.subf %73, %78 : vector<32x32xf32>
    %80 = arith.mulf %79, %79 : vector<32x32xf32>
    %cst_29 = arith.constant dense<0.000000e+00> : vector<32xf32>
    %81 = vector.multi_reduction <add>, %80, %cst_29 [1] : vector<32x32xf32> to vector<32xf32>
    %82 = vector.shape_cast %81 : vector<32xf32> to vector<32x1xf32>
    %cst_30 = arith.constant 3.200000e+01 : f32
    %83 = vector.broadcast %cst_30 : f32 to vector<32x1xf32>
    %84 = arith.divf %82, %83 : vector<32x1xf32>
    %85 = vector.broadcast %77 : vector<32x1xf32> to vector<32x32xf32>
    %86 = arith.subf %73, %85 : vector<32x32xf32>
    %cst_31 = arith.constant 9.99999974E-6 : f32
    %87 = vector.broadcast %cst_31 : f32 to vector<32x1xf32>
    %88 = arith.addf %84, %87 : vector<32x1xf32>
    %89 = math.rsqrt %88 : vector<32x1xf32>
    %90 = vector.broadcast %89 : vector<32x1xf32> to vector<32x32xf32>
    %91 = arith.mulf %86, %90 : vector<32x32xf32>
    %92 = vector.broadcast %71 : vector<1x32xf32> to vector<32x32xf32>
    %93 = arith.mulf %91, %92 : vector<32x32xf32>
    %94 = vector.broadcast %72 : vector<1x32xf32> to vector<32x32xf32>
    %95 = arith.addf %93, %94 : vector<32x32xf32>
    %96 = tpu.iota {dimensions = array<i32: 0>} : vector<8x32xi32>
    %97 = tpu.iota {dimensions = array<i32: 1>} : vector<8x32xi32>
    %c4_i32_32 = arith.constant 4 : i32
    %98 = vector.broadcast %c4_i32_32 : i32 to vector<8x32xi32>
    %99 = arith.shrsi %97, %98 : vector<8x32xi32>
    %100 = arith.cmpi eq, %96, %99 : vector<8x32xi32>
    %cst_33 = arith.constant 6.250000e-02 : f32
    %cst_34 = arith.constant 0.000000e+00 : f32
    %101 = vector.broadcast %cst_33 : f32 to vector<8x32xf32>
    %102 = vector.broadcast %cst_34 : f32 to vector<8x32xf32>
    %103 = arith.select %100, %101, %102 : vector<8x32xi1>, vector<8x32xf32>
    %cst_35 = arith.constant dense<0.000000e+00> : vector<8x32xf32>
    %104 = tpu.matmul %103, %95, %cst_35 {dimension_numbers = #tpu.dot_dimension_numbers<[1], [0], [0], [1], [0, 0, 1, 1], [], []>} : vector<8x32xf32>, vector<32x32xf32>, vector<8x32xf32> -> vector<8x32xf32>
    %c112 = arith.constant 112 : index
    %c0_36 = arith.constant 0 : index
    %105 = vector.load %arg1[%c112, %c0_36] : memref<152x128xf32, #tpu.memory_space<vmem>>, vector<32x128xf32>
    %c144 = arith.constant 144 : index
    %c0_37 = arith.constant 0 : index
    %106 = vector.load %arg1[%c144, %c0_37] : memref<152x128xf32, #tpu.memory_space<vmem>>, vector<1x128xf32>
    %cst_38 = arith.constant dense<0.000000e+00> : vector<8x128xf32>
    %107 = tpu.matmul %104, %105, %cst_38 {dimension_numbers = #tpu.dot_dimension_numbers<[1], [0], [0], [1], [0, 0, 1, 1], [], []>} : vector<8x32xf32>, vector<32x128xf32>, vector<8x128xf32> -> vector<8x128xf32>
    %108 = vector.broadcast %106 : vector<1x128xf32> to vector<8x128xf32>
    %109 = arith.addf %107, %108 : vector<8x128xf32>
    %c0_39 = arith.constant 0 : index
    %c0_40 = arith.constant 0 : index
    %110 = vector.load %arg2[%c0_39, %c0_40] : memref<8x128xf32, #tpu.memory_space<vmem>>, vector<8x128xf32>
    tpu.vector_store %arg2[%c0_39, %c0_40], %109 {strides = array<i32>} : memref<8x128xf32, #tpu.memory_space<vmem>>, vector<8x128xf32>,
    return
  }
}

</mosaic_0001>

<llo_original>
// kernel: tpu_custom_call.1
$region0: #{tpu_custom_call.1}
  #allocation0 [shape = 'u32[]', space=smem, size = 0x4, offset = 0x4, fixed_abs, tag = 'smem constant byte address 0x4 - core index']
  #allocation1 [shape = 'u32[144,128]{1,0:T(1,128)}', space=vmem, size = 0x12000, scoped, tag = 'internal scratch']
  %s0 = inlined_call_operand.vmem [shape: f32[32,8], index: 0, kind: input, shape index: {}]
  %s1 = inlined_call_operand.hbm [shape: f32[152,128], index: 1, kind: input, shape index: {}]
  %s2 = inlined_call_operand.hbm [shape: f32[8,128], index: 2, kind: output, shape index: {}]
  %s3 = sld [smem:[#allocation0]]
  $region22: #{tpu_custom_call.1} parent=0
    _
  %s5 = ssub.s32 1, %s3
  %s6 = scalar_select 0, %s5, %s3
  $region1: #{tpu_custom_call.1} parent=0
    #allocation2 [shape = 'u8[77824]{0}', space=vmem, size = 0x13000, scoped, tag = 'input window, operand 1, single buffered']
    #allocation3 [shape = 's32[1]{0}', space=sflag, size = 0x4, scoped, tag = 'scoped memory for tpu_custom_call.1']
    #allocation4 [shape = 's32[1]{0}', space=sflag, size = 0x4, scoped, tag = 'scoped memory for tpu_custom_call.1']
    #allocation5 [shape = 'u8[4096]{0}', space=vmem, size = 0x1000, scoped, tag = 'output window, operand 0, single buffered']
    %7 = vsyncpa [#allocation3], 0
    %8 = vsyncpa [#allocation4], 0
    // Predicated region
    $region2: #{tpu_custom_call.1} parent=1 // pred_check
      _
    $region3: #{tpu_custom_call.1} parent=1 // pred_check_branch
      %10 = sbr.rel (0) target = $region5
    $region4: #{tpu_custom_call.1} parent=1 // pred_region
      _
    $region5: #{tpu_custom_call.1} parent=1 // pred_fallthru
      _
    // Predicated region
    $region6: #{tpu_custom_call.1} parent=1 // pred_check
      _
    $region7: #{tpu_custom_call.1} parent=1 // pred_check_branch
      %12 = sbr.rel (0) target = $region9
    $region8: #{tpu_custom_call.1} parent=1 // pred_region
      %s14 = ssub.s32 2432, 2432
      %15 = vsyncadd [#allocation3], %s14
      %s16 = sshll.u32 [#allocation2], 4
      %s17 = int_to_ptr.vmem [resolvable:$true] %s16
      %22 = dma.hbm_to_vmem [thread:$0]  %s1, 2432, %s17, [#allocation3], 128, 128, 8
    $region9: #{tpu_custom_call.1} parent=1 // pred_fallthru
      _
    // Predicated region
    $region10: #{tpu_custom_call.1} parent=1 // pred_check
      _
    $region11: #{tpu_custom_call.1} parent=1 // pred_check_branch
      %24 = sbr.rel (0) target = $region13
    $region12: #{tpu_custom_call.1} parent=1 // pred_region
      %25 = dma.done [#allocation3], 2432
    $region13: #{tpu_custom_call.1} parent=1 // pred_fallthru
      _
    %v27 = vld [vmem:[%s0] sm:$0xff]
    %v28 = vld [vmem:[%s0 + $0x8] sm:$0xff]
    %v29 = vld [vmem:[%s0 + $0x10] sm:$0xff]
    %v30 = vld [vmem:[%s0 + $0x18] sm:$0xff]
    %v31 = vld [vmem:[#allocation2 + $0x20] sm:$0xff]
    %v32 = vld [vmem:[#allocation2] sm:$0xff]
    %v33 = vld [vmem:[#allocation2 + $0x8] sm:$0xff]
    %v34 = vld [vmem:[#allocation2 + $0x10] sm:$0xff]
    %v35 = vld [vmem:[#allocation2 + $0x18] sm:$0xff]
    %vm36 = vcmask 64512
    %v38 = vsel %vm36, %v27, 0
    %v41 = vsel %vm36, %v28, 0
    %v44 = vsel %vm36, %v29, 0
    %v47 = vsel %vm36, %v30, 0
    %49 = vmatprep.subr.mxu0 0.0
    %50 = vmatpush1.msra.mxu0 %v31
    %51 = vmatprep.subr.mxu0 0.0
    %52 = vmatpush1.msra.mxu0 0.0
    %53 = vmatprep.subr.mxu0 0.0
    %54 = vmatpush1.msra.mxu0 0.0
    %55 = vmatprep.subr.mxu0 0.0
    %56 = vmatpush1.msra.mxu0 0.0
    %57 = vmatprep.subr.mxu0 0.0
    %58 = vmatpush1.msra.mxu0 0.0
    %59 = vmatprep.subr.mxu0 0.0
    %60 = vmatpush1.msra.mxu0 0.0
    %61 = vmatprep.subr.mxu0 0.0
    %62 = vmatpush1.msra.mxu0 0.0
    %63 = vmatprep.subr.mxu0 0.0
    %64 = vmatpush1.msra.mxu0 0.0
    %65 = vmatprep.subr.mxu0 0.0
    %66 = vmatpush1.msra.mxu0 0.0
    %67 = vmatprep.subr.mxu0 0.0
    %68 = vmatpush1.msra.mxu0 0.0
    %69 = vmatprep.subr.mxu0 0.0
    %70 = vmatpush1.msra.mxu0 0.0
    %71 = vmatprep.subr.mxu0 0.0
    %72 = vmatpush1.msra.mxu0 0.0
    %73 = vmatprep.subr.mxu0 0.0
    %74 = vmatpush1.msra.mxu0 0.0
    %75 = vmatprep.subr.mxu0 0.0
    %76 = vmatpush1.msra.mxu0 0.0
    %77 = vmatprep.subr.mxu0 0.0
    %78 = vmatpush1.msra.mxu0 0.0
    %79 = vmatprep.subr.mxu0 0.0
    %80 = vmatpush1.msra.mxu0 0.0
    %81 = vmatprep.subr.mxu0 0.0
    %82 = vmatpush1.msra.mxu0 0.0
    %83 = vmatprep.subr.mxu0 0.0
    %84 = vmatpush1.msra.mxu0 0.0
    %85 = vmatprep.subr.mxu0 0.0
    %86 = vmatpush1.msra.mxu0 0.0
    %87 = vmatprep.subr.mxu0 0.0
    %88 = vmatpush1.msra.mxu0 0.0
    %89 = vmatprep.subr.mxu0 0.0
    %90 = vmatpush1.msra.mxu0 0.0
    %91 = vmatprep.subr.mxu0 0.0
    %92 = vmatpush1.msra.mxu0 0.0
    %93 = vmatprep.subr.mxu0 0.0
    %94 = vmatpush1.msra.mxu0 0.0
    %95 = vmatprep.subr.mxu0 0.0
    %96 = vmatpush1.msra.mxu0 0.0
    %97 = vmatprep.subr.mxu0 0.0
    %98 = vmatpush1.msra.mxu0 0.0
    %99 = vmatprep.subr.mxu0 0.0
    %100 = vmatpush1.msra.mxu0 0.0
    %101 = vmatprep.subr.mxu0 0.0
    %102 = vmatpush1.msra.mxu0 0.0
    %103 = vmatprep.subr.mxu0 0.0
    %104 = vmatpush1.msra.mxu0 0.0
    %105 = vmatprep.subr.mxu0 0.0
    %106 = vmatpush1.msra.mxu0 0.0
    %107 = vmatprep.subr.mxu0 0.0
    %108 = vmatpush1.msra.mxu0 0.0
    %109 = vmatprep.subr.mxu0 0.0
    %110 = vmatpush1.msra.mxu0 0.0
    %111 = vmatprep.subr.mxu0 0.0
    %112 = vmatpush1.msra.mxu0 0.0
    %113 = vmatprep.mubr.f32.mxu0 0.0
    %114 = vmatmul.mubr.f32.gmra.mrb[0].mxu0 %v38
    %v115 = vpop.f32.mrb[0].mxu0
    %v116 = vadd.f32 %v32, %v115
    %v117 = vpop.f32.mrb[0].mxu0
    %118 = vmatprep.mubr.f32.mxu0 0.0
    %119 = vmatmul.mubr.f32.gmra.mrb[0].mxu0 %v41
    %v120 = vpop.f32.mrb[0].mxu0
    %v121 = vadd.f32 %v33, %v120
    %v122 = vpop.f32.mrb[0].mxu0
    %123 = vmatprep.mubr.f32.mxu0 0.0
    %124 = vmatmul.mubr.f32.gmra.mrb[0].mxu0 %v44
    %v125 = vpop.f32.mrb[0].mxu0
    %v126 = vadd.f32 %v34, %v125
    %v127 = vpop.f32.mrb[0].mxu0
    %128 = vmatprep.mubr.f32.mxu0 0.0
    %129 = vmatmul.mubr.f32.gmra.mrb[0].mxu0 %v47
    %v130 = vpop.f32.mrb[0].mxu0
    %v131 = vadd.f32 %v35, %v130
    %v132 = vpop.f32.mrb[0].mxu0
    %133 = vdwg.mxu0
    %v134 = vpack.c.bf16 %v121, %v116
    %v135 = vpack.c.bf16 %v131, %v126
    %vm136 = vcmask 261120
    %v138 = vsel %vm136, %v134, 0
    %v141 = vsel %vm136, %v135, 0
    %143 = vmatprep.subr.bf16.mxu0 0
    %144 = vmatpush1.bf16.xpose.msra.mxu0 %v138
    %145 = vmatprep.subr.bf16.mxu0 0
    %146 = vmatpush1.bf16.xpose.msra.mxu0 %v141
    %147 = vmatprep.subr.bf16.mxu0 0
    %148 = vmatpush1.bf16.xpose.msra.mxu0 0
    %149 = vmatprep.subr.bf16.mxu0 0
    %150 = vmatpush1.bf16.xpose.msra.mxu0 0
    %151 = vmatprep.subr.bf16.mxu0 0
    %152 = vmatpush1.bf16.xpose.msra.mxu0 0
    %153 = vmatprep.subr.bf16.mxu0 0
    %154 = vmatpush1.bf16.xpose.msra.mxu0 0
    %155 = vmatprep.subr.bf16.mxu0 0
    %156 = vmatpush1.bf16.xpose.msra.mxu0 0
    %157 = vmatprep.subr.bf16.mxu0 0
    %158 = vmatpush1.bf16.xpose.msra.mxu0 0
    %159 = vmatprep.subr.bf16.mxu0 0
    %160 = vmatpush1.bf16.xpose.msra.mxu0 0
    %161 = vmatprep.subr.bf16.mxu0 0
    %162 = vmatpush1.bf16.xpose.msra.mxu0 0
    %163 = vmatprep.subr.bf16.mxu0 0
    %164 = vmatpush1.bf16.xpose.msra.mxu0 0
    %165 = vmatprep.subr.bf16.mxu0 0
    %166 = vmatpush1.bf16.xpose.msra.mxu0 0
    %167 = vmatprep.subr.bf16.mxu0 0
    %168 = vmatpush1.bf16.xpose.msra.mxu0 0
    %169 = vmatprep.subr.bf16.mxu0 0
    %170 = vmatpush1.bf16.xpose.msra.mxu0 0
    %171 = vmatprep.subr.bf16.mxu0 0
    %172 = vmatpush1.bf16.xpose.msra.mxu0 0
    %173 = vmatprep.subr.bf16.mxu0 0
    %174 = vmatpush1.bf16.xpose.msra.mxu0 0
    %175 = vmatprep.mubr.bf16.mxu0 0
    %176 = vmatmul.mubr.bf16.gmra.mrb[0].mxu0 %v138
    %v177 = vpop.f32.mrb[0].mxu0
    %v178 = vadd.f32 0.0, %v177
    %v179 = vpop.f32.mrb[0].mxu0
    %v180 = vpop.f32.mrb[0].mxu0
    %v181 = vadd.f32 0.0, %v180
    %v182 = vpop.f32.mrb[0].mxu0
    %183 = vmatprep.mubr.bf16.mxu0 0
    %184 = vmatmul.mubr.bf16.gmra.mrb[0].mxu0 %v141
    %v185 = vpop.f32.mrb[0].mxu0
    %v186 = vadd.f32 0.0, %v185
    %v187 = vpop.f32.mrb[0].mxu0
    %v188 = vpop.f32.mrb[0].mxu0
    %v189 = vadd.f32 0.0, %v188
    %v190 = vpop.f32.mrb[0].mxu0
    %191 = vdwg.mxu0
    %v192 = vmul.f32 %v178, 0.35355338
    %v193 = vmul.f32 %v181, 0.35355338
    %v194 = vmul.f32 %v186, 0.35355338
    %v195 = vmul.f32 %v189, 0.35355338
    %v196 = vlaneseq
    %v197 = vshrl.u32 %v196, 7
    %v198 = vadd.s32 %v197, 8
    %v199 = vadd.s32 %v197, 16
    %v200 = vadd.s32 %v197, 24
    %v201 = vshra.s32 %v197, 4
    %v202 = vshra.s32 %v198, 4
    %v203 = vshra.s32 %v199, 4
    %v204 = vshra.s32 %v200, 4
    %v205 = vlaneseq
    %v206 = vand.u32 %v205, 127
    %v207 = vshra.s32 %v206, 4
    %vm208 = vcmp.eq.s32.totalorder %v201, %v207
    %vm209 = vcmp.eq.s32.totalorder %v202, %v207
    %vm210 = vcmp.eq.s32.totalorder %v203, %v207
    %vm211 = vcmp.eq.s32.totalorder %v204, %v207
    %v212 = vsel %vm208, %v192, -1e+30
    %v213 = vsel %vm209, %v193, -1e+30
    %v214 = vsel %vm210, %v194, -1e+30
    %v215 = vsel %vm211, %v195, -1e+30
    %v216 = vsel %vm136, %v212, -inf
    %217 = vmax.xlane.f32.xlu0 %v216
    %v218 = vpop.xlane.xlu0 %217
    %v219 = vsel %vm136, %v213, -inf
    %220 = vmax.xlane.f32.xlu0 %v219
    %v221 = vpop.xlane.xlu0 %220
    %v222 = vsel %vm136, %v214, -inf
    %223 = vmax.xlane.f32.xlu0 %v222
    %v224 = vpop.xlane.xlu0 %223
    %v225 = vsel %vm136, %v215, -inf
    %226 = vmax.xlane.f32.xlu0 %v225
    %v227 = vpop.xlane.xlu0 %226
    %v228 = vsub.f32 %v212, %v218
    %v229 = vsub.f32 %v213, %v221
    %v230 = vsub.f32 %v214, %v224
    %v231 = vsub.f32 %v215, %v227
    %v232 = vmul.f32 %v228, 1.442695
    %v233 = vpow.pop %v232
    %v234 = vmul.f32 %v229, 1.442695
    %v235 = vpow.pop %v234
    %v236 = vmul.f32 %v230, 1.442695
    %v237 = vpow.pop %v236
    %v238 = vmul.f32 %v231, 1.442695
    %v239 = vpow.pop %v238
    %v240 = vsel %vm136, %v233, 0.0
    %241 = vadd.xlane.f32.xlu0 %v240
    %v242 = vpop.xlane.xlu0 %241
    %v243 = vsel %vm136, %v235, 0.0
    %244 = vadd.xlane.f32.xlu0 %v243
    %v245 = vpop.xlane.xlu0 %244
    %v246 = vsel %vm136, %v237, 0.0
    %247 = vadd.xlane.f32.xlu0 %v246
    %v248 = vpop.xlane.xlu0 %247
    %v249 = vsel %vm136, %v239, 0.0
    %250 = vadd.xlane.f32.xlu0 %v249
    %v251 = vpop.xlane.xlu0 %250
    %v252 = vrcp.pop %v242
    %v253 = vrcp.pop %v245
    %v254 = vrcp.pop %v248
    %v255 = vrcp.pop %v251
    %v256 = vmul.f32 %v233, %v252
    %v257 = vmul.f32 %v235, %v253
    %v258 = vmul.f32 %v237, %v254
    %v259 = vmul.f32 %v239, %v255
    %v260 = vpack.c.bf16 %v257, %v256
    %v261 = vpack.c.bf16 %v259, %v258
    %v263 = vsel %vm136, %v260, 0
    %v266 = vsel %vm136, %v261, 0
    %268 = vmatprep.subr.bf16.mxu0 0
    %269 = vmatpush1.bf16.msra.mxu0 %v134
    %270 = vmatprep.subr.bf16.mxu0 0
    %271 = vmatpush1.bf16.msra.mxu0 %v135
    %272 = vmatprep.subr.bf16.mxu0 0
    %273 = vmatpush1.bf16.msra.mxu0 0
    %274 = vmatprep.subr.bf16.mxu0 0
    %275 = vmatpush1.bf16.msra.mxu0 0
    %276 = vmatprep.subr.bf16.mxu0 0
    %277 = vmatpush1.bf16.msra.mxu0 0
    %278 = vmatprep.subr.bf16.mxu0 0
    %279 = vmatpush1.bf16.msra.mxu0 0
    %280 = vmatprep.subr.bf16.mxu0 0
    %281 = vmatpush1.bf16.msra.mxu0 0
    %282 = vmatprep.subr.bf16.mxu0 0
    %283 = vmatpush1.bf16.msra.mxu0 0
    %284 = vmatprep.subr.bf16.mxu0 0
    %285 = vmatpush1.bf16.msra.mxu0 0
    %286 = vmatprep.subr.bf16.mxu0 0
    %287 = vmatpush1.bf16.msra.mxu0 0
    %288 = vmatprep.subr.bf16.mxu0 0
    %289 = vmatpush1.bf16.msra.mxu0 0
    %290 = vmatprep.subr.bf16.mxu0 0
    %291 = vmatpush1.bf16.msra.mxu0 0
    %292 = vmatprep.subr.bf16.mxu0 0
    %293 = vmatpush1.bf16.msra.mxu0 0
    %294 = vmatprep.subr.bf16.mxu0 0
    %295 = vmatpush1.bf16.msra.mxu0 0
    %296 = vmatprep.subr.bf16.mxu0 0
    %297 = vmatpush1.bf16.msra.mxu0 0
    %298 = vmatprep.subr.bf16.mxu0 0
    %299 = vmatpush1.bf16.msra.mxu0 0
    %300 = vmatprep.mubr.bf16.mxu0 0
    %301 = vmatmul.mubr.bf16.gmra.mrb[0].mxu0 %v263
    %v302 = vpop.f32.mrb[0].mxu0
    %v303 = vadd.f32 0.0, %v302
    %v304 = vpop.f32.mrb[0].mxu0
    %v305 = vpop.f32.mrb[0].mxu0
    %v306 = vadd.f32 0.0, %v305
    %v307 = vpop.f32.mrb[0].mxu0
    %308 = vmatprep.mubr.bf16.mxu0 0
    %309 = vmatmul.mubr.bf16.gmra.mrb[0].mxu0 %v266
    %v310 = vpop.f32.mrb[0].mxu0
    %v311 = vadd.f32 0.0, %v310
    %v312 = vpop.f32.mrb[0].mxu0
    %v313 = vpop.f32.mrb[0].mxu0
    %v314 = vadd.f32 0.0, %v313
    %v315 = vpop.f32.mrb[0].mxu0
    %316 = vdwg.mxu0
    %v317 = vld [vmem:[#allocation2 + $0x2a] sm:$0x1]
    %v318 = vld [vmem:[#allocation2 + $0x2b] sm:$0x1]
    %v319 = vadd.f32 %v116, %v303
    %v320 = vadd.f32 %v121, %v306
    %v321 = vadd.f32 %v126, %v311
    %v322 = vadd.f32 %v131, %v314
    %v323 = vsel %vm136, %v319, 0.0
    %324 = vadd.xlane.f32.xlu0 %v323
    %v325 = vpop.xlane.xlu0 %324
    %v326 = vsel %vm136, %v320, 0.0
    %327 = vadd.xlane.f32.xlu0 %v326
    %v328 = vpop.xlane.xlu0 %327
    %v329 = vsel %vm136, %v321, 0.0
    %330 = vadd.xlane.f32.xlu0 %v329
    %v331 = vpop.xlane.xlu0 %330
    %v332 = vsel %vm136, %v322, 0.0
    %333 = vadd.xlane.f32.xlu0 %v332
    %v334 = vpop.xlane.xlu0 %333
    %v335 = vrcp.pop 32.0
    %v336 = vmul.f32 %v325, %v335
    %v337 = vmul.f32 %v328, %v335
    %v338 = vmul.f32 %v331, %v335
    %v339 = vmul.f32 %v334, %v335
    %v340 = vsub.f32 %v319, %v336
    %v341 = vsub.f32 %v320, %v337
    %v342 = vsub.f32 %v321, %v338
    %v343 = vsub.f32 %v322, %v339
    %v344 = vmul.f32 %v340, %v340
    %v345 = vmul.f32 %v341, %v341
    %v346 = vmul.f32 %v342, %v342
    %v347 = vmul.f32 %v343, %v343
    %v348 = vsel %vm136, %v344, 0.0
    %349 = vadd.xlane.f32.xlu0 %v348
    %v350 = vpop.xlane.xlu0 %349
    %v351 = vsel %vm136, %v345, 0.0
    %352 = vadd.xlane.f32.xlu0 %v351
    %v353 = vpop.xlane.xlu0 %352
    %v354 = vsel %vm136, %v346, 0.0
    %355 = vadd.xlane.f32.xlu0 %v354
    %v356 = vpop.xlane.xlu0 %355
    %v357 = vsel %vm136, %v347, 0.0
    %358 = vadd.xlane.f32.xlu0 %v357
    %v359 = vpop.xlane.xlu0 %358
    %v360 = vmul.f32 %v350, %v335
    %v361 = vmul.f32 %v353, %v335
    %v362 = vmul.f32 %v356, %v335
    %v363 = vmul.f32 %v359, %v335
    %v364 = vadd.f32 %v360, 1e-05
    %v365 = vadd.f32 %v361, 1e-05
    %v366 = vadd.f32 %v362, 1e-05
    %v367 = vadd.f32 %v363, 1e-05
    %v368 = vrsqrt.pop %v364
    %v369 = vrsqrt.pop %v365
    %v370 = vrsqrt.pop %v366
    %v371 = vrsqrt.pop %v367
    %v372 = vmul.f32 %v340, %v368
    %v373 = vmul.f32 %v341, %v369
    %v374 = vmul.f32 %v342, %v370
    %v375 = vmul.f32 %v343, %v371
    %v376 = vlaneseq
    %v377 = vshrl.u32 %v376, 7
    %v378 = vsub.s32 0, %v377
    %v379 = vrot.slane %v317, %v378
    %v380 = vmul.f32 %v372, %v379
    %v381 = vmul.f32 %v373, %v379
    %v382 = vmul.f32 %v374, %v379
    %v383 = vmul.f32 %v375, %v379
    %v384 = vlaneseq
    %v385 = vshrl.u32 %v384, 7
    %v386 = vsub.s32 0, %v385
    %v387 = vrot.slane %v318, %v386
    %v388 = vadd.f32 %v380, %v387
    %v389 = vadd.f32 %v381, %v387
    %v390 = vadd.f32 %v382, %v387
    %v391 = vadd.f32 %v383, %v387
    %v392 = vld [vmem:[#allocation2 + $0x30] sm:$0xff]
    %v393 = vld [vmem:[#allocation2 + $0x38] sm:$0xff]
    %v394 = vld [vmem:[#allocation2 + $0x40] sm:$0xff]
    %v395 = vld [vmem:[#allocation2 + $0x48] sm:$0xff]
    %v396 = vpack.c.bf16 %v393, %v392
    %v397 = vpack.c.bf16 %v395, %v394
    %v398 = vld [vmem:[#allocation2 + $0x28] sm:$0x1]
    %v399 = vpack.c.bf16 %v389, %v388
    %v400 = vpack.c.bf16 %v391, %v390
    %v401 = vlaneseq
    %v402 = vshrl.u32 %v401, 7
    %v403 = vsub.s32 0, %v402
    %v404 = vrot.slane %v398, %v403
    %v406 = vsel %vm136, %v399, 0
    %v409 = vsel %vm136, %v400, 0
    %411 = vmatprep.subr.bf16.mxu0 0
    %412 = vmatpush1.bf16.msra.mxu0 %v396
    %413 = vmatprep.subr.bf16.mxu0 0
    %414 = vmatpush1.bf16.msra.mxu0 %v397
    %415 = vmatprep.subr.bf16.mxu0 0
    %416 = vmatpush1.bf16.msra.mxu0 0
    %417 = vmatprep.subr.bf16.mxu0 0
    %418 = vmatpush1.bf16.msra.mxu0 0
    %419 = vmatprep.subr.bf16.mxu0 0
    %420 = vmatpush1.bf16.msra.mxu0 0
    %421 = vmatprep.subr.bf16.mxu0 0
    %422 = vmatpush1.bf16.msra.mxu0 0
    %423 = vmatprep.subr.bf16.mxu0 0
    %424 = vmatpush1.bf16.msra.mxu0 0
    %425 = vmatprep.subr.bf16.mxu0 0
    %426 = vmatpush1.bf16.msra.mxu0 0
    %427 = vmatprep.subr.bf16.mxu0 0
    %428 = vmatpush1.bf16.msra.mxu0 0
    %429 = vmatprep.subr.bf16.mxu0 0
    %430 = vmatpush1.bf16.msra.mxu0 0
    %431 = vmatprep.subr.bf16.mxu0 0
    %432 = vmatpush1.bf16.msra.mxu0 0
    %433 = vmatprep.subr.bf16.mxu0 0
    %434 = vmatpush1.bf16.msra.mxu0 0
    %435 = vmatprep.subr.bf16.mxu0 0
    %436 = vmatpush1.bf16.msra.mxu0 0
    %437 = vmatprep.subr.bf16.mxu0 0
    %438 = vmatpush1.bf16.msra.mxu0 0
    %439 = vmatprep.subr.bf16.mxu0 0
    %440 = vmatpush1.bf16.msra.mxu0 0
    %441 = vmatprep.subr.bf16.mxu0 0
    %442 = vmatpush1.bf16.msra.mxu0 0
    %443 = vmatprep.mubr.bf16.mxu0 0
    %444 = vmatmul.mubr.bf16.gmra.mrb[0].mxu0 %v406
    %v445 = vpop.f32.mrb[0].mxu0
    %v446 = vadd.f32 %v404, %v445
    %v447 = vpop.f32.mrb[0].mxu0
    %v448 = vpop.f32.mrb[0].mxu0
    %v449 = vadd.f32 %v404, %v448
    %v450 = vpop.f32.mrb[0].mxu0
    %451 = vmatprep.mubr.bf16.mxu0 0
    %452 = vmatmul.mubr.bf16.gmra.mrb[0].mxu0 %v409
    %v453 = vpop.f32.mrb[0].mxu0
    %v454 = vadd.f32 %v404, %v453
    %v455 = vpop.f32.mrb[0].mxu0
    %v456 = vpop.f32.mrb[0].mxu0
    %v457 = vadd.f32 %v404, %v456
    %v458 = vpop.f32.mrb[0].mxu0
    %459 = vdwg.mxu0
    %v460 = vmax.f32 %v446, 0.0
    %v461 = vmax.f32 %v449, 0.0
    %v462 = vmax.f32 %v454, 0.0
    %v463 = vmax.f32 %v457, 0.0
    %v464 = vld [vmem:[#allocation2 + $0x50] sm:$0xff]
    %v465 = vld [vmem:[#allocation2 + $0x58] sm:$0xff]
    %v466 = vld [vmem:[#allocation2 + $0x60] sm:$0xff]
    %v467 = vld [vmem:[#allocation2 + $0x68] sm:$0xff]
    %v468 = vpack.c.bf16 %v465, %v464
    %v469 = vpack.c.bf16 %v467, %v466
    %v470 = vld [vmem:[#allocation2 + $0x29] sm:$0x1]
    %v471 = vpack.c.bf16 %v461, %v460
    %v472 = vpack.c.bf16 %v463, %v462
    %v473 = vlaneseq
    %v474 = vshrl.u32 %v473, 7
    %v475 = vsub.s32 0, %v474
    %v476 = vrot.slane %v470, %v475
    %v478 = vsel %vm136, %v471, 0
    %v481 = vsel %vm136, %v472, 0
    %483 = vmatprep.subr.bf16.mxu0 0
    %484 = vmatpush1.bf16.msra.mxu0 %v468
    %485 = vmatprep.subr.bf16.mxu0 0
    %486 = vmatpush1.bf16.msra.mxu0 %v469
    %487 = vmatprep.subr.bf16.mxu0 0
    %488 = vmatpush1.bf16.msra.mxu0 0
    %489 = vmatprep.subr.bf16.mxu0 0
    %490 = vmatpush1.bf16.msra.mxu0 0
    %491 = vmatprep.subr.bf16.mxu0 0
    %492 = vmatpush1.bf16.msra.mxu0 0
    %493 = vmatprep.subr.bf16.mxu0 0
    %494 = vmatpush1.bf16.msra.mxu0 0
    %495 = vmatprep.subr.bf16.mxu0 0
    %496 = vmatpush1.bf16.msra.mxu0 0
    %497 = vmatprep.subr.bf16.mxu0 0
    %498 = vmatpush1.bf16.msra.mxu0 0
    %499 = vmatprep.subr.bf16.mxu0 0
    %500 = vmatpush1.bf16.msra.mxu0 0
    %501 = vmatprep.subr.bf16.mxu0 0
    %502 = vmatpush1.bf16.msra.mxu0 0
    %503 = vmatprep.subr.bf16.mxu0 0
    %504 = vmatpush1.bf16.msra.mxu0 0
    %505 = vmatprep.subr.bf16.mxu0 0
    %506 = vmatpush1.bf16.msra.mxu0 0
    %507 = vmatprep.subr.bf16.mxu0 0
    %508 = vmatpush1.bf16.msra.mxu0 0
    %509 = vmatprep.subr.bf16.mxu0 0
    %510 = vmatpush1.bf16.msra.mxu0 0
    %511 = vmatprep.subr.bf16.mxu0 0
    %512 = vmatpush1.bf16.msra.mxu0 0
    %513 = vmatprep.subr.bf16.mxu0 0
    %514 = vmatpush1.bf16.msra.mxu0 0
    %515 = vmatprep.mubr.bf16.mxu0 0
    %516 = vmatmul.mubr.bf16.gmra.mrb[0].mxu0 %v478
    %v517 = vpop.f32.mrb[0].mxu0
    %v518 = vadd.f32 %v476, %v517
    %v519 = vpop.f32.mrb[0].mxu0
    %v520 = vpop.f32.mrb[0].mxu0
    %v521 = vadd.f32 %v476, %v520
    %v522 = vpop.f32.mrb[0].mxu0
    %523 = vmatprep.mubr.bf16.mxu0 0
    %524 = vmatmul.mubr.bf16.gmra.mrb[0].mxu0 %v481
    %v525 = vpop.f32.mrb[0].mxu0
    %v526 = vadd.f32 %v476, %v525
    %v527 = vpop.f32.mrb[0].mxu0
    %v528 = vpop.f32.mrb[0].mxu0
    %v529 = vadd.f32 %v476, %v528
    %v530 = vpop.f32.mrb[0].mxu0
    %531 = vdwg.mxu0
    %v532 = vld [vmem:[#allocation2 + $0x2c] sm:$0x1]
    %v533 = vld [vmem:[#allocation2 + $0x2d] sm:$0x1]
    %v534 = vadd.f32 %v388, %v518
    %v535 = vadd.f32 %v389, %v521
    %v536 = vadd.f32 %v390, %v526
    %v537 = vadd.f32 %v391, %v529
    %v538 = vsel %vm136, %v534, 0.0
    %539 = vadd.xlane.f32.xlu0 %v538
    %v540 = vpop.xlane.xlu0 %539
    %v541 = vsel %vm136, %v535, 0.0
    %542 = vadd.xlane.f32.xlu0 %v541
    %v543 = vpop.xlane.xlu0 %542
    %v544 = vsel %vm136, %v536, 0.0
    %545 = vadd.xlane.f32.xlu0 %v544
    %v546 = vpop.xlane.xlu0 %545
    %v547 = vsel %vm136, %v537, 0.0
    %548 = vadd.xlane.f32.xlu0 %v547
    %v549 = vpop.xlane.xlu0 %548
    %v550 = vmul.f32 %v540, %v335
    %v551 = vmul.f32 %v543, %v335
    %v552 = vmul.f32 %v546, %v335
    %v553 = vmul.f32 %v549, %v335
    %v554 = vsub.f32 %v534, %v550
    %v555 = vsub.f32 %v535, %v551
    %v556 = vsub.f32 %v536, %v552
    %v557 = vsub.f32 %v537, %v553
    %v558 = vmul.f32 %v554, %v554
    %v559 = vmul.f32 %v555, %v555
    %v560 = vmul.f32 %v556, %v556
    %v561 = vmul.f32 %v557, %v557
    %v562 = vsel %vm136, %v558, 0.0
    %563 = vadd.xlane.f32.xlu0 %v562
    %v564 = vpop.xlane.xlu0 %563
    %v565 = vsel %vm136, %v559, 0.0
    %566 = vadd.xlane.f32.xlu0 %v565
    %v567 = vpop.xlane.xlu0 %566
    %v568 = vsel %vm136, %v560, 0.0
    %569 = vadd.xlane.f32.xlu0 %v568
    %v570 = vpop.xlane.xlu0 %569
    %v571 = vsel %vm136, %v561, 0.0
    %572 = vadd.xlane.f32.xlu0 %v571
    %v573 = vpop.xlane.xlu0 %572
    %v574 = vmul.f32 %v564, %v335
    %v575 = vmul.f32 %v567, %v335
    %v576 = vmul.f32 %v570, %v335
    %v577 = vmul.f32 %v573, %v335
    %v578 = vadd.f32 %v574, 1e-05
    %v579 = vadd.f32 %v575, 1e-05
    %v580 = vadd.f32 %v576, 1e-05
    %v581 = vadd.f32 %v577, 1e-05
    %v582 = vrsqrt.pop %v578
    %v583 = vrsqrt.pop %v579
    %v584 = vrsqrt.pop %v580
    %v585 = vrsqrt.pop %v581
    %v586 = vmul.f32 %v554, %v582
    %v587 = vmul.f32 %v555, %v583
    %v588 = vmul.f32 %v556, %v584
    %v589 = vmul.f32 %v557, %v585
    %v590 = vlaneseq
    %v591 = vshrl.u32 %v590, 7
    %v592 = vsub.s32 0, %v591
    %v593 = vrot.slane %v532, %v592
    %v594 = vmul.f32 %v586, %v593
    %v595 = vmul.f32 %v587, %v593
    %v596 = vmul.f32 %v588, %v593
    %v597 = vmul.f32 %v589, %v593
    %v598 = vlaneseq
    %v599 = vshrl.u32 %v598, 7
    %v600 = vsub.s32 0, %v599
    %v601 = vrot.slane %v533, %v600
    %v602 = vadd.f32 %v594, %v601
    %v603 = vadd.f32 %v595, %v601
    %v604 = vadd.f32 %v596, %v601
    %v605 = vadd.f32 %v597, %v601
    %vm606 = vcmp.eq.s32.totalorder %v197, %v207
    %v607 = vsel %vm606, 0.0625, 0.0
    %v609 = vsel %vm136, %v607, 0
    %611 = vmatprep.subr.mxu0 0.0
    %612 = vmatpush1.msra.mxu0 %v602
    %613 = vmatprep.subr.mxu0 0.0
    %614 = vmatpush1.msra.mxu0 %v603
    %615 = vmatprep.subr.mxu0 0.0
    %616 = vmatpush1.msra.mxu0 %v604
    %617 = vmatprep.subr.mxu0 0.0
    %618 = vmatpush1.msra.mxu0 %v605
    %619 = vmatprep.subr.mxu0 0.0
    %620 = vmatpush1.msra.mxu0 0.0
    %621 = vmatprep.subr.mxu0 0.0
    %622 = vmatpush1.msra.mxu0 0.0
    %623 = vmatprep.subr.mxu0 0.0
    %624 = vmatpush1.msra.mxu0 0.0
    %625 = vmatprep.subr.mxu0 0.0
    %626 = vmatpush1.msra.mxu0 0.0
    %627 = vmatprep.subr.mxu0 0.0
    %628 = vmatpush1.msra.mxu0 0.0
    %629 = vmatprep.subr.mxu0 0.0
    %630 = vmatpush1.msra.mxu0 0.0
    %631 = vmatprep.subr.mxu0 0.0
    %632 = vmatpush1.msra.mxu0 0.0
    %633 = vmatprep.subr.mxu0 0.0
    %634 = vmatpush1.msra.mxu0 0.0
    %635 = vmatprep.subr.mxu0 0.0
    %636 = vmatpush1.msra.mxu0 0.0
    %637 = vmatprep.subr.mxu0 0.0
    %638 = vmatpush1.msra.mxu0 0.0
    %639 = vmatprep.subr.mxu0 0.0
    %640 = vmatpush1.msra.mxu0 0.0
    %641 = vmatprep.subr.mxu0 0.0
    %642 = vmatpush1.msra.mxu0 0.0
    %643 = vmatprep.subr.mxu0 0.0
    %644 = vmatpush1.msra.mxu0 0.0
    %645 = vmatprep.subr.mxu0 0.0
    %646 = vmatpush1.msra.mxu0 0.0
    %647 = vmatprep.subr.mxu0 0.0
    %648 = vmatpush1.msra.mxu0 0.0
    %649 = vmatprep.subr.mxu0 0.0
    %650 = vmatpush1.msra.mxu0 0.0
    %651 = vmatprep.subr.mxu0 0.0
    %652 = vmatpush1.msra.mxu0 0.0
    %653 = vmatprep.subr.mxu0 0.0
    %654 = vmatpush1.msra.mxu0 0.0
    %655 = vmatprep.subr.mxu0 0.0
    %656 = vmatpush1.msra.mxu0 0.0
    %657 = vmatprep.subr.mxu0 0.0
    %658 = vmatpush1.msra.mxu0 0.0
    %659 = vmatprep.subr.mxu0 0.0
    %660 = vmatpush1.msra.mxu0 0.0
    %661 = vmatprep.subr.mxu0 0.0
    %662 = vmatpush1.msra.mxu0 0.0
    %663 = vmatprep.subr.mxu0 0.0
    %664 = vmatpush1.msra.mxu0 0.0
    %665 = vmatprep.subr.mxu0 0.0
    %666 = vmatpush1.msra.mxu0 0.0
    %667 = vmatprep.subr.mxu0 0.0
    %668 = vmatpush1.msra.mxu0 0.0
    %669 = vmatprep.subr.mxu0 0.0
    %670 = vmatpush1.msra.mxu0 0.0
    %671 = vmatprep.subr.mxu0 0.0
    %672 = vmatpush1.msra.mxu0 0.0
    %673 = vmatprep.subr.mxu0 0.0
    %674 = vmatpush1.msra.mxu0 0.0
    %675 = vmatprep.mubr.f32.mxu0 0.0
    %676 = vmatmul.mubr.f32.gmra.mrb[0].mxu0 %v609
    %v677 = vpop.f32.mrb[0].mxu0
    %v678 = vadd.f32 0.0, %v677
    %v679 = vpop.f32.mrb[0].mxu0
    %680 = vdwg.mxu0
    %v681 = vld [vmem:[#allocation2 + $0x70] sm:$0xff]
    %v682 = vld [vmem:[#allocation2 + $0x78] sm:$0xff]
    %v683 = vld [vmem:[#allocation2 + $0x80] sm:$0xff]
    %v684 = vld [vmem:[#allocation2 + $0x88] sm:$0xff]
    %v685 = vld [vmem:[#allocation2 + $0x90] sm:$0x1]
    %v686 = vlaneseq
    %v687 = vshrl.u32 %v686, 7
    %v688 = vsub.s32 0, %v687
    %v689 = vrot.slane %v685, %v688
    %v691 = vsel %vm136, %v678, 0
    %693 = vmatprep.subr.mxu0 0.0
    %694 = vmatpush1.msra.mxu0 %v681
    %695 = vmatprep.subr.mxu0 0.0
    %696 = vmatpush1.msra.mxu0 %v682
    %697 = vmatprep.subr.mxu0 0.0
    %698 = vmatpush1.msra.mxu0 %v683
    %699 = vmatprep.subr.mxu0 0.0
    %700 = vmatpush1.msra.mxu0 %v684
    %701 = vmatprep.subr.mxu0 0.0
    %702 = vmatpush1.msra.mxu0 0.0
    %703 = vmatprep.subr.mxu0 0.0
    %704 = vmatpush1.msra.mxu0 0.0
    %705 = vmatprep.subr.mxu0 0.0
    %706 = vmatpush1.msra.mxu0 0.0
    %707 = vmatprep.subr.mxu0 0.0
    %708 = vmatpush1.msra.mxu0 0.0
    %709 = vmatprep.subr.mxu0 0.0
    %710 = vmatpush1.msra.mxu0 0.0
    %711 = vmatprep.subr.mxu0 0.0
    %712 = vmatpush1.msra.mxu0 0.0
    %713 = vmatprep.subr.mxu0 0.0
    %714 = vmatpush1.msra.mxu0 0.0
    %715 = vmatprep.subr.mxu0 0.0
    %716 = vmatpush1.msra.mxu0 0.0
    %717 = vmatprep.subr.mxu0 0.0
    %718 = vmatpush1.msra.mxu0 0.0
    %719 = vmatprep.subr.mxu0 0.0
    %720 = vmatpush1.msra.mxu0 0.0
    %721 = vmatprep.subr.mxu0 0.0
    %722 = vmatpush1.msra.mxu0 0.0
    %723 = vmatprep.subr.mxu0 0.0
    %724 = vmatpush1.msra.mxu0 0.0
    %725 = vmatprep.subr.mxu0 0.0
    %726 = vmatpush1.msra.mxu0 0.0
    %727 = vmatprep.subr.mxu0 0.0
    %728 = vmatpush1.msra.mxu0 0.0
    %729 = vmatprep.subr.mxu0 0.0
    %730 = vmatpush1.msra.mxu0 0.0
    %731 = vmatprep.subr.mxu0 0.0
    %732 = vmatpush1.msra.mxu0 0.0
    %733 = vmatprep.subr.mxu0 0.0
    %734 = vmatpush1.msra.mxu0 0.0
    %735 = vmatprep.subr.mxu0 0.0
    %736 = vmatpush1.msra.mxu0 0.0
    %737 = vmatprep.subr.mxu0 0.0
    %738 = vmatpush1.msra.mxu0 0.0
    %739 = vmatprep.subr.mxu0 0.0
    %740 = vmatpush1.msra.mxu0 0.0
    %741 = vmatprep.subr.mxu0 0.0
    %742 = vmatpush1.msra.mxu0 0.0
    %743 = vmatprep.subr.mxu0 0.0
    %744 = vmatpush1.msra.mxu0 0.0
    %745 = vmatprep.subr.mxu0 0.0
    %746 = vmatpush1.msra.mxu0 0.0
    %747 = vmatprep.subr.mxu0 0.0
    %748 = vmatpush1.msra.mxu0 0.0
    %749 = vmatprep.subr.mxu0 0.0
    %750 = vmatpush1.msra.mxu0 0.0
    %751 = vmatprep.subr.mxu0 0.0
    %752 = vmatpush1.msra.mxu0 0.0
    %753 = vmatprep.subr.mxu0 0.0
    %754 = vmatpush1.msra.mxu0 0.0
    %755 = vmatprep.subr.mxu0 0.0
    %756 = vmatpush1.msra.mxu0 0.0
    %757 = vmatprep.mubr.f32.mxu0 0.0
    %758 = vmatmul.mubr.f32.gmra.mrb[0].mxu0 %v691
    %v759 = vpop.f32.mrb[0].mxu0
    %v760 = vadd.f32 %v689, %v759
    %v761 = vpop.f32.mrb[0].mxu0
    %762 = vdwg.mxu0
    %763 = vst [vmem:[#allocation5] sm:$0xff] %v760
    // Predicated region
    $region14: #{tpu_custom_call.1} parent=1 // pred_check
      _
    $region15: #{tpu_custom_call.1} parent=1 // pred_check_branch
      %765 = sbr.rel (0) target = $region17
    $region16: #{tpu_custom_call.1} parent=1 // pred_region
      %s767 = ssub.s32 128, 128
      %768 = vsyncadd [#allocation4], %s767
      %s770 = sshll.u32 [#allocation5], 4
      %s771 = int_to_ptr.vmem [resolvable:$true] %s770
      %773 = dma.vmem_to_hbm [thread:$0]  %s771, 128, %s2, [#allocation4]
    $region17: #{tpu_custom_call.1} parent=1 // pred_fallthru
      _
    // Predicated region
    $region18: #{tpu_custom_call.1} parent=1 // pred_check
      _
    $region19: #{tpu_custom_call.1} parent=1 // pred_check_branch
      %775 = sbr.rel (0) target = $region21
    $region20: #{tpu_custom_call.1} parent=1 // pred_region
      %776 = dma.done [#allocation4], 128
    $region21: #{tpu_custom_call.1} parent=1 // pred_fallthru
      _
    %777 = vsyncpa [#allocation3], 1
    %778 = vsyncpa [#allocation4], 1

</llo_original>
